<compile_context>
chip_gen: v7x
topology: tpu7x:2x2x1
jax: 0.10.0
libtpu: 0.0.40
codegen_flags: <defaults>
</compile_context>

<pallas_src>
import functools

import jax
import jax.numpy as jnp
from jax import lax
from jax.experimental import pallas as pl
from jax.experimental.pallas import tpu as pltpu


def _onehot_gather_kernel(idx_ref, x_ref, o_ref, acc_ref, *, l_total):
    """acc[j, :] += sum_t onehot[j, t] * x[k_off + t, :] over K chunks (exact gather)."""
    k = pl.program_id(2)
    k_tile = x_ref.shape[0]
    l_out = acc_ref.shape[0]

    @pl.when(k == 0)
    def _init():
        acc_ref[...] = jnp.zeros_like(acc_ref)

    k_off = k * k_tile
    idx = idx_ref[...]  # (L_out_pad, 1) int32
    # onehot[j, t] = 1.0 iff idx[j] == k_off + t   (exactly one 1.0 per row over all k).
    # Cheap per-step VPU compare over a (L_out, k_tile) chunk; fully hidden under DMA.
    iota = lax.broadcasted_iota(jnp.int32, (l_out, k_tile), 1) + k_off
    onehot = (iota == idx).astype(jnp.bfloat16)

    x_blk = x_ref[...]  # (k_tile, d_tile)
    if l_total % k_tile != 0:
        # Final K block reads past the token axis; zero the garbage rows so
        # 0 * garbage (possibly NaN/Inf) cannot contaminate the accumulation.
        row = lax.broadcasted_iota(jnp.int32, (k_tile, 1), 0) + k_off
        x_blk = jnp.where(row < l_total, x_blk, jnp.zeros_like(x_blk))

    if x_blk.dtype == jnp.bfloat16:
        # bf16 * 1.0 with f32 accumulation of a single nonzero term: exact gather.
        acc_ref[...] += jnp.dot(onehot, x_blk, preferred_element_type=jnp.float32)
    else:
        # Exact gather for f32/f16: split each value into three bf16-representable
        # chunks (8+8+8 mantissa bits); each chunk is consumed immediately so only one
        # residual buffer stays live (smaller VMEM/vreg footprint than x0/x1/x2 at once).
        r = x_blk.astype(jnp.float32)
        acc = acc_ref[...]
        c = r.astype(jnp.bfloat16)
        acc = acc + jnp.dot(onehot, c, preferred_element_type=jnp.float32)
        r = r - c.astype(jnp.float32)
        c = r.astype(jnp.bfloat16)
        acc = acc + jnp.dot(onehot, c, preferred_element_type=jnp.float32)
        r = r - c.astype(jnp.float32)
        c = r.astype(jnp.bfloat16)
        acc_ref[...] = acc + jnp.dot(onehot, c, preferred_element_type=jnp.float32)

    @pl.when(k == pl.num_programs(2) - 1)
    def _store():
        o_ref[...] = acc_ref[...].astype(o_ref.dtype)


def _step_vmem_bytes(l_out_pad, k_tile, d_tile, itemsize, f32_split):
    x_blk = k_tile * d_tile * itemsize
    out_blk = l_out_pad * d_tile * itemsize
    idx_blk = l_out_pad * 128 * 4                     # int32 column, lane-padded in VMEM
    acc = l_out_pad * d_tile * 4                      # f32 accumulator scratch
    onehot = l_out_pad * k_tile * 2                   # bf16 one-hot temporary
    temps = k_tile * d_tile * (12 if f32_split else 4)  # f32 upcast + residual + bf16 chunk
    return 2 * (x_blk + out_blk + idx_blk) + acc + onehot + temps


def _pick_tiles(l_total, l_out_pad, d, itemsize, f32_split, budget):
    # Largest lane-dense chunk first (biggest measured lever for mem-bound kernels).
    if d % 128 == 0:
        d_cands = [c for c in range(min(d, 512), 0, -128) if d % c == 0] or [128]
    else:
        d_cands = [d]  # must equal the full dim when not a 128-multiple
    # K-axis (token) chunk: single block if it fits, otherwise 8-aligned chunks.
    k_cands = [l_total] + [c for c in (2048, 1024, 512, 256, 128, 64, 32, 16, 8)
                           if c < l_total]
    for d_tile in d_cands:
        for k_tile in k_cands:
            b = _step_vmem_bytes(l_out_pad, k_tile, d_tile, itemsize, f32_split)
            if b <= budget:
                return d_tile, k_tile, b
    d_tile, k_tile = d_cands[-1], k_cands[-1]
    return d_tile, k_tile, _step_vmem_bytes(l_out_pad, k_tile, d_tile, itemsize, f32_split)


def patch_dropout(x, key, prob, num_prefix_tokens: int = 1, training: bool = True):
    """JAX/Pallas equivalent of PatchDropout.forward (training path)."""
    assert 0.0 <= prob < 1.0, prob
    if (not training) or prob == 0.0:
        return x
    assert x.ndim == 3, x.shape
    assert x.dtype in (jnp.float32, jnp.bfloat16, jnp.float16), x.dtype

    B, L_total, D = x.shape
    P = int(num_prefix_tokens)
    L = L_total - P
    num_keep = max(1, int(L * (1.0 - prob)))
    L_out = P + num_keep

    # torch.randn(B, L) + topk(num_keep).indices  (data-dependent control, plain JAX).
    rand = jax.random.normal(key, (B, L), dtype=jnp.float32)
    keep_indices = lax.top_k(rand, num_keep)[1].astype(jnp.int32)  # (B, num_keep)

    # Prefix (cls) tokens kept verbatim at the front: fold them into one index table.
    if P:
        prefix_idx = jnp.broadcast_to(jnp.arange(P, dtype=jnp.int32)[None, :], (B, P))
        full_idx = jnp.concatenate([prefix_idx, keep_indices + P], axis=1)  # (B, L_out)
    else:
        full_idx = keep_indices

    # Pad gathered rows to a sublane multiple; dummy rows gather token 0, sliced off below.
    itemsize = jnp.dtype(x.dtype).itemsize
    sub = 8 if itemsize == 4 else 16
    L_out_pad = -(-L_out // sub) * sub
    if L_out_pad != L_out:
        full_idx = jnp.pad(full_idx, ((0, 0), (0, L_out_pad - L_out)))
    full_idx = full_idx[..., None]  # (B, L_out_pad, 1): column layout -> lane broadcast

    f32_split = x.dtype != jnp.bfloat16

    # VMEM budget from the actual part (64 MiB/TC on v7x, 128 MiB on v5e/v6e).
    vmem_cap = 64 * 2**20
    try:
        vmem_cap = int(getattr(pltpu.get_tpu_info(), "vmem_capacity_bytes", vmem_cap)
                       or vmem_cap)
    except Exception:
        pass
    budget = int(0.70 * vmem_cap)

    d_tile, k_tile, step_bytes = _pick_tiles(L_total, L_out_pad, D, itemsize,
                                             f32_split, budget)
    n_d = D // d_tile
    n_k = -(-L_total // k_tile)
    vmem_limit = int(min(0.85 * vmem_cap, max(2 * step_bytes, 32 * 2**20)))

    grid_spec = pltpu.PrefetchScalarGridSpec(
        num_scalar_prefetch=0,
        grid=(B, n_d, n_k),
        in_specs=[
            pl.BlockSpec((None, L_out_pad, 1), lambda b, d, k: (b, 0, 0)),
            pl.BlockSpec((None, k_tile, d_tile), lambda b, d, k: (b, k, d)),
        ],
        out_specs=pl.BlockSpec((None, L_out_pad, d_tile), lambda b, d, k: (b, 0, d)),
        scratch_shapes=[pltpu.VMEM((L_out_pad, d_tile), jnp.float32)],
    )

    out = pl.pallas_call(
        functools.partial(_onehot_gather_kernel, l_total=L_total),
        out_shape=jax.ShapeDtypeStruct((B, L_out_pad, D), x.dtype),
        grid_spec=grid_spec,
        compiler_params=pltpu.CompilerParams(
            dimension_semantics=("parallel", "parallel", "arbitrary"),
            vmem_limit_bytes=vmem_limit,
        ),
    )(full_idx, x)

    if L_out_pad != L_out:
        out = out[:, :L_out, :]  # fuses with the consumer in a real model
    return out


if __name__ == "__main__":
    # Small shapes consistent with the module: B=2, 1 prefix (cls) token +
    # 16 patch tokens, embed dim 128 (lane-dense output).
    B, P, L, D = 2, 1, 16, 128
    prob = 0.5
    num_keep = max(1, int(L * (1.0 - prob)))

    key = jax.random.PRNGKey(0)
    kx, knoise = jax.random.split(key)
    x = jax.random.normal(kx, (B, P + L, D), dtype=jnp.float32)

    # Pure-JAX reference of the same gather semantics (same noise key).
    rand = jax.random.normal(knoise, (B, L), dtype=jnp.float32)
    keep_idx = lax.top_k(rand, num_keep)[1].astype(jnp.int32)
    full_idx = jnp.concatenate(
        [jnp.broadcast_to(jnp.arange(P, dtype=jnp.int32)[None, :], (B, P)),
         keep_idx + P],
        axis=1,
    )
    ref = jnp.take_along_axis(x, full_idx[..., None], axis=1)

    # f32 path (3-pass exact MXU gather)
    out = jax.block_until_ready(
        patch_dropout(x, knoise, prob, num_prefix_tokens=P, training=True))
    assert out.shape == ref.shape, (out.shape, ref.shape)
    assert jnp.allclose(out, ref, rtol=1e-6, atol=1e-6), "f32 gather mismatch"

    # bf16 path (single-pass exact MXU gather)
    xb = x.astype(jnp.bfloat16)
    outb = jax.block_until_ready(
        patch_dropout(xb, knoise, prob, num_prefix_tokens=P, training=True))
    refb = jnp.take_along_axis(xb, full_idx[..., None], axis=1)
    assert outb.shape == refb.shape
    assert jnp.allclose(outb.astype(jnp.float32), refb.astype(jnp.float32),
                        rtol=1e-2, atol=1e-2), "bf16 gather mismatch"

    print("KERNEL_OK")
</pallas_src>

<mosaic_0001>
module attributes {stable_mosaic.version = 11 : i64} {
  func.func @_onehot_gather_kernel(%arg0: i32, %arg1: i32, %arg2: i32, %arg3: memref<1x16x1xi32, #tpu.memory_space<vmem>>, %arg4: memref<1x17x128xf32, #tpu.memory_space<vmem>>, %arg5: memref<1x16x128xf32, #tpu.memory_space<vmem>>, %arg6: memref<16x128xf32, #tpu.memory_space<vmem>>) attributes {dimension_semantics = [#tpu.dimension_semantics<parallel>, #tpu.dimension_semantics<parallel>, #tpu.dimension_semantics<arbitrary>], iteration_bounds = array<i64: 2, 1, 1>, scalar_prefetch = 0 : i64, scratch_operands = 1 : i64, tpu.core_type = #tpu.core_type<tc>, window_params = [{transform_indices = @transform_0, window_bounds = array<i64: 1, 16, 1>}, {transform_indices = @transform_1, window_bounds = array<i64: 1, 17, 128>}, {transform_indices = @transform_2, window_bounds = array<i64: 1, 16, 128>}]} {
    %c0_i32 = arith.constant 0 : i32
    %0 = arith.cmpi eq, %arg2, %c0_i32 : i32
    %1 = arith.extui %0 : i1 to i32
    %c0_i32_0 = arith.constant 0 : i32
    %2 = arith.cmpi ne, %1, %c0_i32_0 : i32
    scf.if %2 {
      %cst_14 = arith.constant 0.000000e+00 : f32
      %34 = vector.broadcast %cst_14 : f32 to vector<16x128xf32>
      %c0_15 = arith.constant 0 : index
      %c0_16 = arith.constant 0 : index
      %35 = vector.load %arg6[%c0_15, %c0_16] : memref<16x128xf32, #tpu.memory_space<vmem>>, vector<16x128xf32>
      tpu.vector_store %arg6[%c0_15, %c0_16], %34 {strides = array<i32>} : memref<16x128xf32, #tpu.memory_space<vmem>>, vector<16x128xf32>,
    } else {
    }
    %c17_i32 = arith.constant 17 : i32
    %3 = arith.muli %arg2, %c17_i32 : i32
    %c0 = arith.constant 0 : index
    %c0_1 = arith.constant 0 : index
    %c0_2 = arith.constant 0 : index
    %4 = vector.load %arg3[%c0, %c0_1, %c0_2] : memref<1x16x1xi32, #tpu.memory_space<vmem>>, vector<1x16x1xi32>
    %5 = vector.shape_cast %4 : vector<1x16x1xi32> to vector<16x1xi32>
    %6 = tpu.iota {dimensions = array<i32: 1>} : vector<16x17xi32>
    %7 = vector.broadcast %3 : i32 to vector<16x17xi32>
    %8 = arith.addi %6, %7 : vector<16x17xi32>
    %9 = vector.broadcast %5 : vector<16x1xi32> to vector<16x17xi32>
    %10 = arith.cmpi eq, %8, %9 : vector<16x17xi32>
    %11 = arith.extui %10 : vector<16x17xi1> to vector<16x17xi32>
    %12 = arith.sitofp %11 : vector<16x17xi32> to vector<16x17xf32>
    %13 = arith.truncf %12 : vector<16x17xf32> to vector<16x17xbf16>
    %c0_3 = arith.constant 0 : index
    %c0_4 = arith.constant 0 : index
    %c0_5 = arith.constant 0 : index
    %14 = vector.load %arg4[%c0_3, %c0_4, %c0_5] : memref<1x17x128xf32, #tpu.memory_space<vmem>>, vector<1x17x128xf32>
    %15 = vector.shape_cast %14 : vector<1x17x128xf32> to vector<17x128xf32>
    %c0_6 = arith.constant 0 : index
    %c0_7 = arith.constant 0 : index
    %16 = vector.load %arg6[%c0_6, %c0_7] : memref<16x128xf32, #tpu.memory_space<vmem>>, vector<16x128xf32>
    %17 = arith.truncf %15 : vector<17x128xf32> to vector<17x128xbf16>
    %cst = arith.constant dense<0.000000e+00> : vector<16x128xf32>
    %18 = tpu.matmul %13, %17, %cst {dimension_numbers = #tpu.dot_dimension_numbers<[1], [0], [0], [1], [0, 0, 1, 1], [], []>} : vector<16x17xbf16>, vector<17x128xbf16>, vector<16x128xf32> -> vector<16x128xf32>
    %19 = arith.addf %16, %18 : vector<16x128xf32>
    %20 = arith.extf %17 : vector<17x128xbf16> to vector<17x128xf32>
    %21 = arith.subf %15, %20 : vector<17x128xf32>
    %22 = arith.truncf %21 : vector<17x128xf32> to vector<17x128xbf16>
    %cst_8 = arith.constant dense<0.000000e+00> : vector<16x128xf32>
    %23 = tpu.matmul %13, %22, %cst_8 {dimension_numbers = #tpu.dot_dimension_numbers<[1], [0], [0], [1], [0, 0, 1, 1], [], []>} : vector<16x17xbf16>, vector<17x128xbf16>, vector<16x128xf32> -> vector<16x128xf32>
    %24 = arith.addf %19, %23 : vector<16x128xf32>
    %25 = arith.extf %22 : vector<17x128xbf16> to vector<17x128xf32>
    %26 = arith.subf %21, %25 : vector<17x128xf32>
    %27 = arith.truncf %26 : vector<17x128xf32> to vector<17x128xbf16>
    %cst_9 = arith.constant dense<0.000000e+00> : vector<16x128xf32>
    %28 = tpu.matmul %13, %27, %cst_9 {dimension_numbers = #tpu.dot_dimension_numbers<[1], [0], [0], [1], [0, 0, 1, 1], [], []>} : vector<16x17xbf16>, vector<17x128xbf16>, vector<16x128xf32> -> vector<16x128xf32>
    %29 = arith.addf %24, %28 : vector<16x128xf32>
    %c0_10 = arith.constant 0 : index
    %c0_11 = arith.constant 0 : index
    %30 = vector.load %arg6[%c0_10, %c0_11] : memref<16x128xf32, #tpu.memory_space<vmem>>, vector<16x128xf32>
    tpu.vector_store %arg6[%c0_10, %c0_11], %29 {strides = array<i32>} : memref<16x128xf32, #tpu.memory_space<vmem>>, vector<16x128xf32>,
    %c0_i32_12 = arith.constant 0 : i32
    %31 = arith.cmpi eq, %arg2, %c0_i32_12 : i32
    %32 = arith.extui %31 : i1 to i32
    %c0_i32_13 = arith.constant 0 : i32
    %33 = arith.cmpi ne, %32, %c0_i32_13 : i32
    scf.if %33 {
      %c0_14 = arith.constant 0 : index
      %c0_15 = arith.constant 0 : index
      %34 = vector.load %arg6[%c0_14, %c0_15] : memref<16x128xf32, #tpu.memory_space<vmem>>, vector<16x128xf32>
      %c0_16 = arith.constant 0 : index
      %c0_17 = arith.constant 0 : index
      %c0_18 = arith.constant 0 : index
      %35 = vector.load %arg5[%c0_16, %c0_17, %c0_18] : memref<1x16x128xf32, #tpu.memory_space<vmem>>, vector<1x16x128xf32>
      %36 = vector.shape_cast %35 : vector<1x16x128xf32> to vector<16x128xf32>
      %37 = vector.shape_cast %34 : vector<16x128xf32> to vector<1x16x128xf32>
      tpu.vector_store %arg5[%c0_16, %c0_17, %c0_18], %37 {strides = array<i32>} : memref<1x16x128xf32, #tpu.memory_space<vmem>>, vector<1x16x128xf32>,
    } else {
    }
    return
  }
  func.func @transform_0(%arg0: i32, %arg1: i32, %arg2: i32) -> (i32, i32, i32) {
    %c0_i32 = arith.constant 0 : i32
    %c0_i32_0 = arith.constant 0 : i32
    %c0_i32_1 = arith.constant 0 : i32
    return %arg0, %c0_i32, %c0_i32_0 : i32, i32, i32
  }
  func.func @transform_1(%arg0: i32, %arg1: i32, %arg2: i32) -> (i32, i32, i32) {
    %c0_i32 = arith.constant 0 : i32
    return %arg0, %arg2, %arg1 : i32, i32, i32
  }
  func.func @transform_2(%arg0: i32, %arg1: i32, %arg2: i32) -> (i32, i32, i32) {
    %c0_i32 = arith.constant 0 : i32
    %c0_i32_0 = arith.constant 0 : i32
    return %arg0, %c0_i32, %arg1 : i32, i32, i32
  }
}

</mosaic_0001>

<llo_original>
// kernel: tpu_custom_call.1
$region0: #{tpu_custom_call.1}
  #allocation0 [shape = 'u32[]', space=smem, size = 0x4, offset = 0x4, fixed_abs, tag = 'smem constant byte address 0x4 - core index']
  #allocation1 [shape = 'u32[144,128]{1,0:T(1,128)}', space=vmem, size = 0x12000, scoped, tag = 'internal scratch']
  #allocation2 [shape = 'f32[16,128]{1,0:T(8,128)}', space=vmem, size = 0x2000, scoped, tag = 'scratch operand']
  %s0 = inlined_call_operand.vmem [shape: s32[2,16,1], index: 0, kind: input, shape index: {}]
  %s1 = inlined_call_operand.vmem [shape: f32[2,17,128], index: 1, kind: input, shape index: {}]
  %s2 = inlined_call_operand.hbm [shape: f32[2,16,128], index: 2, kind: output, shape index: {}]
  %s3 = sld [smem:[#allocation0]]
  $region49: #{tpu_custom_call.1} parent=0
    _
  %s5 = ssub.s32 1, %s3
  %s6 = scalar_select 0, %s5, %s3
  $region1: #{tpu_custom_call.1} parent=0
    #allocation3 [shape = 'u8[16384]{0}', space=vmem, size = 0x4000, scoped, tag = 'output window, operand 0']
    #allocation4 [shape = 's32[2]{0}', space=sflag, size = 0x8, scoped, tag = 'scoped memory for tpu_custom_call.1']
    %7 = vsyncpa [#allocation4], 0
    %s8 = scalar_lea.sflag [#allocation4], 1
    %9 = vsyncpa %s8, 0
    loop: start=0, step=1, limit=4
    $region2: #{tpu_custom_call.1} parent=1 // loop_pre_header
      _
    $region3: #{tpu_custom_call.1} parent=1 // loop_header
      %s11 = sphi 0, %s15
      %p12 = scmp.ge.s32.totalorder %s11, 4
      %s18 = sphi 0, %s37
      %s19 = sphi 0, %s33
      %s20 = sphi 0, %s29
      %s21 = sphi 0, %s18
      %s22 = sphi 0, %s19
      %s23 = sphi 0, %s20
      %s24 = sphi 0, %s21
      %s25 = sphi 0, %s22
      %s26 = sphi 0, %s23
      %s40 = sphi 0, %s42
      %s43 = sphi 0, %s40
      %s44 = sphi 0, %s43
      %s60 = sphi 0, %s44
      %s70 = sphi 0, %s72
      %s73 = sphi 0, %s70
      %s74 = sphi 0, %s73
      %s90 = sphi 0, %s74
      %s98 = sphi 0, %s100
      %s101 = sphi 0, %s98
      %s102 = sphi 0, %s101
      %s118 = sphi 0, %s102
    $region4: #{tpu_custom_call.1} parent=1 // loop_header_branch
      %14 = sbr.rel (%p12) target = $region8
    $region5: #{tpu_custom_call.1} parent=1 // loop_body
      %s16 = ssub.s32 %s11, 1
      %s17 = ssub.s32 %s11, 2
      %s27 = sadd.s32 1, %s20
      %p28 = scmp.ge.s32.totalorder %s27, 1
      %s29 = scalar_select %p28, 0, %s27
      %s30 = sadd.s32 1, %s19
      %s31 = scalar_select %p28, %s30, %s19
      %p32 = scmp.ge.s32.totalorder %s31, 1
      %s33 = scalar_select %p32, 0, %s31
      %s34 = sadd.s32 1, %s18
      %s35 = scalar_select %p32, %s34, %s18
      %p36 = scmp.ge.s32.totalorder %s35, 2
      %s37 = scalar_select %p36, 0, %s35
      %s38 = ssub.s32 %s18, %s37
      %p39 = scmp.eq.s32.totalorder %s38, 0
      %s41 = sadd.s32 %s40, 1
      %s42 = scalar_select %p39, %s40, %s41
      %p45 = pneg %p39
      %p46 = scmp.eq.s32.totalorder %s11, 1
      %p47 = por %p45, %p46
      %p48 = scmp.ne.s32.totalorder %s40, %s43
      %p49 = scmp.eq.s32.totalorder %s11, 0
      %p50 = por %p48, %p49
      %p51 = scmp.ne.s32.totalorder %s40, %s43
      %p52 = scmp.eq.s32.totalorder %s16, 1
      %p53 = por %p51, %p52
      %p54 = scmp.ne.s32.totalorder %s43, %s44
      %p55 = scmp.eq.s32.totalorder %s16, 0
      %p56 = por %p54, %p55
      %p57 = scmp.ne.s32.totalorder %s43, %s44
      %p58 = scmp.eq.s32.totalorder %s17, 1
      %p59 = por %p57, %p58
      %p61 = scmp.ne.s32.totalorder %s44, %s60
      %p62 = scmp.eq.s32.totalorder %s17, 0
      %p63 = por %p61, %p62
      %s64 = ssub.s32 %s18, %s37
      %s65 = ssub.s32 %s20, %s29
      %s66 = sor.u32 %s64, %s65
      %s67 = ssub.s32 %s19, %s33
      %s68 = sor.u32 %s66, %s67
      %p69 = scmp.eq.s32.totalorder %s68, 0
      %s71 = sadd.s32 %s70, 1
      %s72 = scalar_select %p69, %s70, %s71
      %p75 = pneg %p69
      %p76 = scmp.eq.s32.totalorder %s11, 1
      %p77 = por %p75, %p76
      %p78 = scmp.ne.s32.totalorder %s70, %s73
      %p79 = scmp.eq.s32.totalorder %s11, 0
      %p80 = por %p78, %p79
      %p81 = scmp.ne.s32.totalorder %s70, %s73
      %p82 = scmp.eq.s32.totalorder %s16, 1
      %p83 = por %p81, %p82
      %p84 = scmp.ne.s32.totalorder %s73, %s74
      %p85 = scmp.eq.s32.totalorder %s16, 0
      %p86 = por %p84, %p85
      %p87 = scmp.ne.s32.totalorder %s73, %s74
      %p88 = scmp.eq.s32.totalorder %s17, 1
      %p89 = por %p87, %p88
      %p91 = scmp.ne.s32.totalorder %s74, %s90
      %p92 = scmp.eq.s32.totalorder %s17, 0
      %p93 = por %p91, %p92
      %s94 = ssub.s32 %s18, %s37
      %s95 = ssub.s32 %s19, %s33
      %s96 = sor.u32 %s94, %s95
      %p97 = scmp.eq.s32.totalorder %s96, 0
      %s99 = sadd.s32 %s98, 1
      %s100 = scalar_select %p97, %s98, %s99
      %p103 = pneg %p97
      %p104 = scmp.eq.s32.totalorder %s11, 1
      %p105 = por %p103, %p104
      %p106 = scmp.ne.s32.totalorder %s98, %s101
      %p107 = scmp.eq.s32.totalorder %s11, 0
      %p108 = por %p106, %p107
      %p109 = scmp.ne.s32.totalorder %s98, %s101
      %p110 = scmp.eq.s32.totalorder %s16, 1
      %p111 = por %p109, %p110
      %p112 = scmp.ne.s32.totalorder %s101, %s102
      %p113 = scmp.eq.s32.totalorder %s16, 0
      %p114 = por %p112, %p113
      %p115 = scmp.ne.s32.totalorder %s101, %s102
      %p116 = scmp.eq.s32.totalorder %s17, 1
      %p117 = por %p115, %p116
      %p119 = scmp.ne.s32.totalorder %s102, %s118
      %p120 = scmp.eq.s32.totalorder %s17, 0
      %p121 = por %p119, %p120
      %p122 = scmp.le.s32.totalorder 1, %s11
      %p123 = scmp.lt.s32.totalorder %s11, 3
      %p124 = pnand %p122, %p123
      %p125 = pneg %p124
      // Predicated region
      $region9: #{tpu_custom_call.1} parent=5 // pred_check
        _
      $region10: #{tpu_custom_call.1} parent=5 // pred_check_branch
        %127 = sbr.rel (%p124) target = $region12
      $region11: #{tpu_custom_call.1} parent=5 // pred_region
        %s128 = ssub.s32 %s11, 1
      $region12: #{tpu_custom_call.1} parent=5 // pred_fallthru
        _
      %p129 = scmp.lt.s32.totalorder %s11, 2
      // Predicated region
      $region13: #{tpu_custom_call.1} parent=5 // pred_check
        %p130 = pneg %p129
      $region14: #{tpu_custom_call.1} parent=5 // pred_check_branch
        %132 = sbr.rel (%p130) target = $region16
      $region15: #{tpu_custom_call.1} parent=5 // pred_region
        // Predicated region
        $region17: #{tpu_custom_call.1} parent=15 // pred_check
          %p133 = pneg %p50
        $region18: #{tpu_custom_call.1} parent=15 // pred_check_branch
          %135 = sbr.rel (%p133) target = $region20
        $region19: #{tpu_custom_call.1} parent=15 // pred_region
          %p136 = scmp.lt.s32.totalorder %s18, 1
          %s137 = scalar_select %p136, %s18, 1
          %s138 = smul.addr %s137, 2
          %s139 = smul.addr %s138, 8
          %s140 = scalar_lea.vmem %s0, %s139
        $region20: #{tpu_custom_call.1} parent=15 // pred_fallthru
          _
        // Predicated region
        $region21: #{tpu_custom_call.1} parent=15 // pred_check
          %p141 = pneg %p80
        $region22: #{tpu_custom_call.1} parent=15 // pred_check_branch
          %143 = sbr.rel (%p141) target = $region24
        $region23: #{tpu_custom_call.1} parent=15 // pred_region
          %s144 = smul.u32 3, %s20
          %p145 = scmp.lt.s32.totalorder %s18, 1
          %s146 = scalar_select %p145, %s18, 1
          %p147 = scmp.lt.s32.totalorder %s144, 2
          %s148 = scalar_select %p147, %s144, 2
          %p149 = scmp.lt.s32.totalorder %s19, 0
          %s150 = scalar_select %p149, %s19, 0
          %s151 = sadd.s32 %s150, %s148
          %s152 = smul.addr %s146, 3
          %s153 = sadd.s32 %s151, %s152
          %s154 = smul.addr %s153, 8
          %s155 = scalar_lea.vmem %s1, %s154
          %s156 = smul.u32 3, %s20
        $region24: #{tpu_custom_call.1} parent=15 // pred_fallthru
          _
      $region16: #{tpu_custom_call.1} parent=5 // pred_fallthru
        _
      %p157 = scmp.le.s32.totalorder 1, %s11
      %p158 = scmp.lt.s32.totalorder %s11, 3
      %p159 = pnand %p157, %p158
      %p160 = pneg %p159
      // Predicated region
      $region25: #{tpu_custom_call.1} parent=5 // pred_check
        _
      $region26: #{tpu_custom_call.1} parent=5 // pred_check_branch
        %162 = sbr.rel (%p159) target = $region28
      $region27: #{tpu_custom_call.1} parent=5 // pred_region
        %s163 = ssub.s32 %s11, 1
        %p164 = scmp.lt.s32.totalorder %s21, 1
        %s165 = scalar_select %p164, %s21, 1
        %s166 = smul.addr %s165, 2
        %s167 = smul.addr %s166, 8
        %s168 = scalar_lea.vmem %s0, %s167
        %p169 = pneg %p56
        %p170 = pneg %p53
        %s171 = smul.u32 3, %s23
        %p172 = scmp.lt.s32.totalorder %s21, 1
        %s173 = scalar_select %p172, %s21, 1
        %p174 = scmp.lt.s32.totalorder %s171, 2
        %s175 = scalar_select %p174, %s171, 2
        %p176 = scmp.lt.s32.totalorder %s22, 0
        %s177 = scalar_select %p176, %s22, 0
        %s178 = sadd.s32 %s177, %s175
        %s179 = smul.addr %s173, 3
        %s180 = sadd.s32 %s178, %s179
        %s181 = smul.addr %s180, 8
        %s182 = scalar_lea.vmem %s1, %s181
        %p183 = pneg %p86
        %p184 = pneg %p83
        %p185 = pneg %p114
        %p186 = pneg %p111
        %s187 = sand.u32 %s101, 1
        %s188 = scalar_lea.sflag [#allocation4], %s187
        %s189 = sand.u32 %s101, 1
        %s190 = smul.addr %s189, 16
        %s191 = scalar_lea.vmem [#allocation3], %s190
        %p192 = scmp.lt.s32.totalorder %s21, 1
        %s193 = scalar_select %p192, %s21, 1
        %s194 = smul.addr %s193, 2
        %s195 = smul.addr %s194, 8
        %s196 = scalar_lea.vmem %s0, %s195
        %s197 = smul.u32 3, %s23
        %p198 = scmp.lt.s32.totalorder %s21, 1
        %s199 = scalar_select %p198, %s21, 1
        %p200 = scmp.lt.s32.totalorder %s197, 2
        %s201 = scalar_select %p200, %s197, 2
        %p202 = scmp.lt.s32.totalorder %s22, 0
        %s203 = scalar_select %p202, %s22, 0
        %s204 = sadd.s32 %s203, %s201
        %s205 = smul.addr %s199, 3
        %s206 = sadd.s32 %s204, %s205
        %s207 = smul.addr %s206, 8
        %s208 = scalar_lea.vmem %s1, %s207
        %s209 = smul.u32 3, %s23
        %p211 = scmp.eq.s32.totalorder %s23, 0
        // Predicated region
        $region29: #{tpu_custom_call.1} parent=27 // pred_check
          %p212 = pneg %p211
        $region30: #{tpu_custom_call.1} parent=27 // pred_check_branch
          %214 = sbr.rel (%p212) target = $region32
        $region31: #{tpu_custom_call.1} parent=27 // pred_region
          %215 = vst [vmem:[#allocation2] sm:$0xff] 0.0
          %216 = vst [vmem:[#allocation2 + $0x8] sm:$0xff] 0.0
        $region32: #{tpu_custom_call.1} parent=27 // pred_fallthru
          _
        %s217 = smul.u32 %s23, 17
        %v218 = vld [vmem:[%s196] sm:$0xff]
        %v219 = vld [vmem:[%s196 + $0x8] sm:$0xff]
        %v220 = vlaneseq
        %v221 = vand.u32 %v220, 127
        %v222 = vstv %s217
        %v223 = vadd.s32 %v221, %v222
        %224 = vset.pattern.permute.xlu0 0
        %225 = vperm.xlu0 %224, %v218
        %v226 = vpop.permute.xlu0 %225
        %227 = vset.pattern.permute.xlu0 0
        %228 = vperm.xlu0 %227, %v219
        %v229 = vpop.permute.xlu0 %228
        %vm230 = vcmp.eq.s32.totalorder %v223, %v226
        %vm231 = vcmp.eq.s32.totalorder %v223, %v229
        %v232 = vsel %vm230, 1, 0
        %v233 = vsel %vm231, 1, 0
        %v234 = vcvt.s32.f32 %v232
        %v235 = vcvt.s32.f32 %v233
        %v236 = vpack.c.bf16 %v235, %v234
        %v237 = vld [vmem:[%s208] sm:$0xff]
        %v238 = vld [vmem:[%s208 + $0x8] sm:$0xff]
        %v239 = vld [vmem:[%s208 + $0x10] sm:$0x1]
        %v240 = vld [vmem:[#allocation2] sm:$0xff]
        %v241 = vld [vmem:[#allocation2 + $0x8] sm:$0xff]
        %v242 = vpack.c.bf16 %v238, %v237
        %v243 = vpack.c.bf16 %v239, %v239
        %vm244 = vcmask 138240
        %v246 = vsel %vm244, %v236, 0
        %vm248 = vcmask 1040384
        %v249 = vsel 0, 4294967295, 65535
        %v250 = vsel %vm248, %v249, 0
        %v252 = vand.u32 %v243, %v250
        %254 = vmatprep.subr.bf16.mxu0 0
        %255 = vmatpush1.bf16.msra.mxu0 %v242
        %256 = vmatprep.subr.bf16.mxu0 0
        %257 = vmatpush1.bf16.msra.mxu0 %v252
        %258 = vmatprep.subr.bf16.mxu0 0
        %259 = vmatpush1.bf16.msra.mxu0 0
        %260 = vmatprep.subr.bf16.mxu0 0
        %261 = vmatpush1.bf16.msra.mxu0 0
        %262 = vmatprep.subr.bf16.mxu0 0
        %263 = vmatpush1.bf16.msra.mxu0 0
        %264 = vmatprep.subr.bf16.mxu0 0
        %265 = vmatpush1.bf16.msra.mxu0 0
        %266 = vmatprep.subr.bf16.mxu0 0
        %267 = vmatpush1.bf16.msra.mxu0 0
        %268 = vmatprep.subr.bf16.mxu0 0
        %269 = vmatpush1.bf16.msra.mxu0 0
        %270 = vmatprep.subr.bf16.mxu0 0
        %271 = vmatpush1.bf16.msra.mxu0 0
        %272 = vmatprep.subr.bf16.mxu0 0
        %273 = vmatpush1.bf16.msra.mxu0 0
        %274 = vmatprep.subr.bf16.mxu0 0
        %275 = vmatpush1.bf16.msra.mxu0 0
        %276 = vmatprep.subr.bf16.mxu0 0
        %277 = vmatpush1.bf16.msra.mxu0 0
        %278 = vmatprep.subr.bf16.mxu0 0
        %279 = vmatpush1.bf16.msra.mxu0 0
        %280 = vmatprep.subr.bf16.mxu0 0
        %281 = vmatpush1.bf16.msra.mxu0 0
        %282 = vmatprep.subr.bf16.mxu0 0
        %283 = vmatpush1.bf16.msra.mxu0 0
        %284 = vmatprep.subr.bf16.mxu0 0
        %285 = vmatpush1.bf16.msra.mxu0 0
        %286 = vmatprep.mubr.bf16.mxu0 0
        %287 = vmatmul.mubr.bf16.gmra.mrb[0].mxu0 %v246
        %v288 = vpop.f32.mrb[0].mxu0
        %v289 = vadd.f32 0.0, %v288
        %v290 = vpop.f32.mrb[0].mxu0
        %v291 = vpop.f32.mrb[0].mxu0
        %v292 = vadd.f32 0.0, %v291
        %v293 = vpop.f32.mrb[0].mxu0
        %294 = vdwg.mxu0
        %v295 = vadd.f32 %v240, %v289
        %v296 = vadd.f32 %v241, %v292
        %v297 = vunpack.c.l.bf16 %v242
        %v298 = vunpack.c.h.bf16 %v242
        %v299 = vunpack.c.l.bf16 %v243
        %v300 = vsub.f32 %v237, %v297
        %v301 = vsub.f32 %v238, %v298
        %v302 = vsub.f32 %v239, %v299
        %v303 = vpack.c.bf16 %v301, %v300
        %v304 = vpack.c.bf16 %v302, %v302
        %v306 = vand.u32 %v304, %v250
        %308 = vmatprep.subr.bf16.mxu0 0
        %309 = vmatpush1.bf16.msra.mxu0 %v303
        %310 = vmatprep.subr.bf16.mxu0 0
        %311 = vmatpush1.bf16.msra.mxu0 %v306
        %312 = vmatprep.subr.bf16.mxu0 0
        %313 = vmatpush1.bf16.msra.mxu0 0
        %314 = vmatprep.subr.bf16.mxu0 0
        %315 = vmatpush1.bf16.msra.mxu0 0
        %316 = vmatprep.subr.bf16.mxu0 0
        %317 = vmatpush1.bf16.msra.mxu0 0
        %318 = vmatprep.subr.bf16.mxu0 0
        %319 = vmatpush1.bf16.msra.mxu0 0
        %320 = vmatprep.subr.bf16.mxu0 0
        %321 = vmatpush1.bf16.msra.mxu0 0
        %322 = vmatprep.subr.bf16.mxu0 0
        %323 = vmatpush1.bf16.msra.mxu0 0
        %324 = vmatprep.subr.bf16.mxu0 0
        %325 = vmatpush1.bf16.msra.mxu0 0
        %326 = vmatprep.subr.bf16.mxu0 0
        %327 = vmatpush1.bf16.msra.mxu0 0
        %328 = vmatprep.subr.bf16.mxu0 0
        %329 = vmatpush1.bf16.msra.mxu0 0
        %330 = vmatprep.subr.bf16.mxu0 0
        %331 = vmatpush1.bf16.msra.mxu0 0
        %332 = vmatprep.subr.bf16.mxu0 0
        %333 = vmatpush1.bf16.msra.mxu0 0
        %334 = vmatprep.subr.bf16.mxu0 0
        %335 = vmatpush1.bf16.msra.mxu0 0
        %336 = vmatprep.subr.bf16.mxu0 0
        %337 = vmatpush1.bf16.msra.mxu0 0
        %338 = vmatprep.subr.bf16.mxu0 0
        %339 = vmatpush1.bf16.msra.mxu0 0
        %340 = vmatprep.mubr.bf16.mxu0 0
        %341 = vmatmul.mubr.bf16.gmra.mrb[0].mxu0 %v246
        %v342 = vpop.f32.mrb[0].mxu0
        %v343 = vadd.f32 0.0, %v342
        %v344 = vpop.f32.mrb[0].mxu0
        %v345 = vpop.f32.mrb[0].mxu0
        %v346 = vadd.f32 0.0, %v345
        %v347 = vpop.f32.mrb[0].mxu0
        %348 = vdwg.mxu0
        %v349 = vadd.f32 %v295, %v343
        %v350 = vadd.f32 %v296, %v346
        %v351 = vunpack.c.l.bf16 %v303
        %v352 = vunpack.c.h.bf16 %v303
        %v353 = vunpack.c.l.bf16 %v304
        %v354 = vsub.f32 %v300, %v351
        %v355 = vsub.f32 %v301, %v352
        %v356 = vsub.f32 %v302, %v353
        %v357 = vpack.c.bf16 %v355, %v354
        %v358 = vpack.c.bf16 %v356, %v356
        %v360 = vand.u32 %v358, %v250
        %362 = vmatprep.subr.bf16.mxu0 0
        %363 = vmatpush1.bf16.msra.mxu0 %v357
        %364 = vmatprep.subr.bf16.mxu0 0
        %365 = vmatpush1.bf16.msra.mxu0 %v360
        %366 = vmatprep.subr.bf16.mxu0 0
        %367 = vmatpush1.bf16.msra.mxu0 0
        %368 = vmatprep.subr.bf16.mxu0 0
        %369 = vmatpush1.bf16.msra.mxu0 0
        %370 = vmatprep.subr.bf16.mxu0 0
        %371 = vmatpush1.bf16.msra.mxu0 0
        %372 = vmatprep.subr.bf16.mxu0 0
        %373 = vmatpush1.bf16.msra.mxu0 0
        %374 = vmatprep.subr.bf16.mxu0 0
        %375 = vmatpush1.bf16.msra.mxu0 0
        %376 = vmatprep.subr.bf16.mxu0 0
        %377 = vmatpush1.bf16.msra.mxu0 0
        %378 = vmatprep.subr.bf16.mxu0 0
        %379 = vmatpush1.bf16.msra.mxu0 0
        %380 = vmatprep.subr.bf16.mxu0 0
        %381 = vmatpush1.bf16.msra.mxu0 0
        %382 = vmatprep.subr.bf16.mxu0 0
        %383 = vmatpush1.bf16.msra.mxu0 0
        %384 = vmatprep.subr.bf16.mxu0 0
        %385 = vmatpush1.bf16.msra.mxu0 0
        %386 = vmatprep.subr.bf16.mxu0 0
        %387 = vmatpush1.bf16.msra.mxu0 0
        %388 = vmatprep.subr.bf16.mxu0 0
        %389 = vmatpush1.bf16.msra.mxu0 0
        %390 = vmatprep.subr.bf16.mxu0 0
        %391 = vmatpush1.bf16.msra.mxu0 0
        %392 = vmatprep.subr.bf16.mxu0 0
        %393 = vmatpush1.bf16.msra.mxu0 0
        %394 = vmatprep.mubr.bf16.mxu0 0
        %395 = vmatmul.mubr.bf16.gmra.mrb[0].mxu0 %v246
        %v396 = vpop.f32.mrb[0].mxu0
        %v397 = vadd.f32 0.0, %v396
        %v398 = vpop.f32.mrb[0].mxu0
        %v399 = vpop.f32.mrb[0].mxu0
        %v400 = vadd.f32 0.0, %v399
        %v401 = vpop.f32.mrb[0].mxu0
        %402 = vdwg.mxu0
        %v403 = vadd.f32 %v349, %v397
        %v404 = vadd.f32 %v350, %v400
        %405 = vst [vmem:[#allocation2] sm:$0xff] %v403
        %406 = vst [vmem:[#allocation2 + $0x8] sm:$0xff] %v404
        // Predicated region
        $region33: #{tpu_custom_call.1} parent=27 // pred_check
          %p407 = pneg %p211
        $region34: #{tpu_custom_call.1} parent=27 // pred_check_branch
          %409 = sbr.rel (%p407) target = $region36
        $region35: #{tpu_custom_call.1} parent=27 // pred_region
          %v410 = vld [vmem:[#allocation2] sm:$0xff]
          %v411 = vld [vmem:[#allocation2 + $0x8] sm:$0xff]
          %412 = vst [vmem:[%s191] sm:$0xff] %v410
          %413 = vst [vmem:[%s191 + $0x8] sm:$0xff] %v411
        $region36: #{tpu_custom_call.1} parent=27 // pred_fallthru
          _
        %s414 = sand.u32 %s101, 1
        %s415 = scalar_lea.sflag [#allocation4], %s414
        %s416 = sand.u32 %s101, 1
        %s417 = smul.addr %s416, 16
        %s418 = scalar_lea.vmem [#allocation3], %s417
        // Predicated region
        $region37: #{tpu_custom_call.1} parent=27 // pred_check
          %p419 = pneg %p111
        $region38: #{tpu_custom_call.1} parent=27 // pred_check_branch
          %421 = sbr.rel (%p419) target = $region40
        $region39: #{tpu_custom_call.1} parent=27 // pred_region
          %s423 = ssub.s32 256, 256
          %424 = vsyncadd %s415, %s423
          %s425 = smul.addr %s21, 2
          %s426 = sadd.s32 %s22, %s425
          %s427 = smul.addr %s426, 128
          %s428 = scalar_lea.hbm %s2, %s427
          %s429 = sshll.u32 %s418, 4
          %s430 = int_to_ptr.vmem [resolvable:$true] %s429
          %435 = dma.vmem_to_hbm [thread:$0]  %s430, 256, %s428, %s415, 128, 128, 8
        $region40: #{tpu_custom_call.1} parent=27 // pred_fallthru
          _
      $region28: #{tpu_custom_call.1} parent=5 // pred_fallthru
        _
      %p436 = scmp.le.s32.totalorder 2, %s11
      // Predicated region
      $region41: #{tpu_custom_call.1} parent=5 // pred_check
        %p437 = pneg %p436
      $region42: #{tpu_custom_call.1} parent=5 // pred_check_branch
        %439 = sbr.rel (%p437) target = $region44
      $region43: #{tpu_custom_call.1} parent=5 // pred_region
        %s440 = ssub.s32 %s11, 2
        // Predicated region
        $region45: #{tpu_custom_call.1} parent=43 // pred_check
          %p441 = pneg %p117
        $region46: #{tpu_custom_call.1} parent=43 // pred_check_branch
          %443 = sbr.rel (%p441) target = $region48
        $region47: #{tpu_custom_call.1} parent=43 // pred_region
          %s444 = sand.u32 %s102, 1
          %s445 = scalar_lea.sflag [#allocation4], %s444
          %s446 = sand.u32 %s102, 1
          %s447 = smul.addr %s446, 16
          %s448 = scalar_lea.vmem [#allocation3], %s447
          %449 = dma.done %s445, 256
        $region48: #{tpu_custom_call.1} parent=43 // pred_fallthru
          _
      $region44: #{tpu_custom_call.1} parent=5 // pred_fallthru
        _
    $region6: #{tpu_custom_call.1} parent=1 // loop_footer
      %s15 = sadd.s32 1, %s11
    $region7: #{tpu_custom_call.1} parent=1 // loop_footer_branch
      %10 = sbr.rel target = $region3
    $region8: #{tpu_custom_call.1} parent=1 // loop_exit
      _
    %450 = vsyncpa [#allocation4], 1
    %s451 = scalar_lea.sflag [#allocation4], 1
    %452 = vsyncpa %s451, 1

</llo_original>
